<compile_context>
chip_gen: v5e
topology: v5e:2x2
jax: 0.10.0
libtpu: 0.0.40
codegen_flags: <defaults>
</compile_context>

<pallas_src>
import functools

import jax
import jax.numpy as jnp
import numpy as np
from jax import lax
from jax.experimental import pallas as pl
from jax.experimental.pallas import tpu as pltpu

# Same epsilon as the PyTorch module: torch.finfo(torch.float32).eps
# (NOTE: canonical ProGAN uses 1e-8; the module being matched uses f32 eps.)
EPS = float(np.finfo(np.float32).eps)

_LANE = 128
# Scoped-VMEM ceiling that is safe on every generation (v7x physical = 64 MiB).
_VMEM_LIMIT_BYTES = 32 << 20
# Cap on the input block so in+out double buffering (~4x) fits the limit above.
_MAX_BLOCK_BYTES = 6 << 20


def _pixelnorm_kernel(x_ref, o_ref):
    # Block: (Nb, C, tile_hw). Channel reduction over axis=1 (sublane axis);
    # spatial columns on the lane axis (multiple of 128 or full extent).
    x = x_ref[...].astype(jnp.float32)
    ms = jnp.mean(x * x, axis=1, keepdims=True)   # (Nb, 1, tile_hw)
    inv = lax.rsqrt(ms + EPS)                     # EUP-friendly
    o_ref[...] = (x * inv).astype(o_ref.dtype)


def _reference_pixel_norm(x):
    # Pure-JAX path mirroring the PyTorch semantics (NCHW, dim=1).
    ms = jnp.mean(x.astype(jnp.float32) ** 2, axis=1, keepdims=True)
    return (x / jnp.sqrt(ms + EPS)).astype(x.dtype)


@functools.partial(jax.jit, static_argnames=("target_tile_bytes",))
def pixel_norm(x, target_tile_bytes=3 << 20):
    """x: (N, C, H, W) -> (N, C, H, W), PixelNorm over the channel dim."""
    N, C, H, W = x.shape
    HW = H * W
    itemsize = jnp.dtype(x.dtype).itemsize

    # Lane-sparse spatial maps (HW < 128): stores would be masked vst.msk and
    # per-call overhead dominates -> let XLA's fused elementwise path handle it.
    if HW < _LANE:
        return _reference_pixel_norm(x)

    # Guard very wide channel counts: even the minimum legal block (1, C, 128)
    # with double buffering must fit the VMEM budget, otherwise fall back.
    min_block_bytes = C * _LANE * itemsize
    if 4 * min_block_bytes > _VMEM_LIMIT_BYTES:
        return _reference_pixel_norm(x)

    block_budget = min(int(target_tile_bytes), _MAX_BLOCK_BYTES)

    x3d = x.reshape(N, C, HW)          # contiguous merge, no HBM pass
    row_bytes = C * HW * itemsize      # one full batch row

    if row_bytes <= block_budget:
        # Small feature maps: pack multiple batch rows per block so each grid
        # step moves ~block_budget instead of a few KiB.
        tile_hw = HW
        nb = max(1, min(N, block_budget // max(1, row_bytes)))
    else:
        nb = 1
        tile_hw = (block_budget // max(1, C * itemsize)) // _LANE * _LANE
        tile_hw = max(_LANE, tile_hw)
        if tile_hw >= HW:
            tile_hw = HW
        else:
            # Rebalance so there is no tiny ragged trailing spatial tile
            # (idle-TC / half-empty-step cost is largest on v7x's 2 TCs).
            n_tiles = pl.cdiv(HW, tile_hw)
            tile_hw = min(HW, ((pl.cdiv(HW, n_tiles) + _LANE - 1) // _LANE) * _LANE)

    grid = (pl.cdiv(N, nb), pl.cdiv(HW, tile_hw))

    out3d = pl.pallas_call(
        _pixelnorm_kernel,
        out_shape=jax.ShapeDtypeStruct((N, C, HW), x.dtype),
        grid_spec=pltpu.PrefetchScalarGridSpec(
            num_scalar_prefetch=0,
            grid=grid,
            in_specs=[pl.BlockSpec((nb, C, tile_hw), lambda i, j: (i, 0, j))],
            out_specs=pl.BlockSpec((nb, C, tile_hw), lambda i, j: (i, 0, j)),
        ),
        compiler_params=pltpu.CompilerParams(
            dimension_semantics=("parallel", "parallel"),
            vmem_limit_bytes=_VMEM_LIMIT_BYTES,
        ),
    )(x3d)

    return out3d.reshape(N, C, H, W)


if __name__ == "__main__":
    root = jax.random.PRNGKey(0)
    k1, k2, k3 = jax.random.split(root, 3)

    # Primary case: small NCHW shape matching the module's typical use.
    x = jax.random.normal(k1, (2, 4, 16, 16), dtype=jnp.float32)
    out = jax.block_until_ready(pixel_norm(x))
    np.testing.assert_allclose(np.asarray(out),
                               np.asarray(_reference_pixel_norm(x)),
                               rtol=1e-5, atol=1e-5)

    # Batch-blocked case with a ragged trailing batch block (N % Nb != 0):
    # tiny tile budget forces Nb=2 over N=5 -> grid (3, 1) with padded rows.
    x2 = jax.random.normal(k2, (5, 4, 16, 16), dtype=jnp.float32)
    out2 = jax.block_until_ready(pixel_norm(x2, target_tile_bytes=8192))
    np.testing.assert_allclose(np.asarray(out2),
                               np.asarray(_reference_pixel_norm(x2)),
                               rtol=1e-5, atol=1e-5)

    # Lane-sparse spatial case (HW < 128) dispatches to the fused XLA path.
    x3 = jax.random.normal(k3, (2, 8, 8, 8), dtype=jnp.float32)
    out3 = jax.block_until_ready(pixel_norm(x3))
    np.testing.assert_allclose(np.asarray(out3),
                               np.asarray(_reference_pixel_norm(x3)),
                               rtol=1e-5, atol=1e-5)

    print("KERNEL_OK")
</pallas_src>

<mosaic_0001>
module attributes {stable_mosaic.version = 11 : i64} {
  func.func @_pixelnorm_kernel(%arg0: i32, %arg1: i32, %arg2: memref<2x4x256xf32, #tpu.memory_space<vmem>>, %arg3: memref<2x4x256xf32, #tpu.memory_space<vmem>>) attributes {dimension_semantics = [#tpu.dimension_semantics<parallel>, #tpu.dimension_semantics<parallel>], iteration_bounds = array<i64: 1, 1>, scalar_prefetch = 0 : i64, scratch_operands = 0 : i64, tpu.core_type = #tpu.core_type<tc>, window_params = [{transform_indices = @transform_0, window_bounds = array<i64: 2, 4, 256>}, {transform_indices = @transform_1, window_bounds = array<i64: 2, 4, 256>}]} {
    %c0 = arith.constant 0 : index
    %c0_0 = arith.constant 0 : index
    %c0_1 = arith.constant 0 : index
    %0 = vector.load %arg2[%c0, %c0_0, %c0_1] : memref<2x4x256xf32, #tpu.memory_space<vmem>>, vector<2x4x256xf32>
    %1 = arith.mulf %0, %0 : vector<2x4x256xf32>
    %cst = arith.constant dense<0.000000e+00> : vector<2x256xf32>
    %2 = vector.multi_reduction <add>, %1, %cst [1] : vector<2x4x256xf32> to vector<2x256xf32>
    %3 = vector.shape_cast %2 : vector<2x256xf32> to vector<2x1x256xf32>
    %cst_2 = arith.constant 4.000000e+00 : f32
    %4 = vector.broadcast %cst_2 : f32 to vector<2x1x256xf32>
    %5 = arith.divf %3, %4 : vector<2x1x256xf32>
    %cst_3 = arith.constant 1.1920929E-7 : f32
    %6 = vector.broadcast %cst_3 : f32 to vector<2x1x256xf32>
    %7 = arith.addf %5, %6 : vector<2x1x256xf32>
    %8 = math.rsqrt %7 : vector<2x1x256xf32>
    %9 = vector.broadcast %8 : vector<2x1x256xf32> to vector<2x4x256xf32>
    %10 = arith.mulf %0, %9 : vector<2x4x256xf32>
    %c0_4 = arith.constant 0 : index
    %c0_5 = arith.constant 0 : index
    %c0_6 = arith.constant 0 : index
    %11 = vector.load %arg3[%c0_4, %c0_5, %c0_6] : memref<2x4x256xf32, #tpu.memory_space<vmem>>, vector<2x4x256xf32>
    tpu.vector_store %arg3[%c0_4, %c0_5, %c0_6], %10 {strides = array<i32>} : memref<2x4x256xf32, #tpu.memory_space<vmem>>, vector<2x4x256xf32>,
    return
  }
  func.func @transform_0(%arg0: i32, %arg1: i32) -> (i32, i32, i32) {
    %c0_i32 = arith.constant 0 : i32
    %c0_i32_0 = arith.constant 0 : i32
    return %arg0, %c0_i32, %arg1 : i32, i32, i32
  }
  func.func @transform_1(%arg0: i32, %arg1: i32) -> (i32, i32, i32) {
    %c0_i32 = arith.constant 0 : i32
    %c0_i32_0 = arith.constant 0 : i32
    return %arg0, %c0_i32, %arg1 : i32, i32, i32
  }
}

</mosaic_0001>

<llo_original>
// kernel: pixel_norm.1
$region0: #{pixel_norm.1}
  #allocation0 [shape = 'u32[]', space=smem, size = 0x4, offset = 0x4, fixed_abs, tag = 'smem constant byte address 0x4 - core index']
  #allocation1 [shape = 'u32[72,128]{1,0:T(1,128)}', space=vmem, size = 0x9000, scoped, tag = 'internal scratch']
  %s0 = inlined_call_operand.vmem [shape: f32[2,4,256], index: 0, kind: input, shape index: {}]
  %s1 = inlined_call_operand.vmem [shape: f32[2,4,256], index: 1, kind: output, shape index: {}]
  %s2 = sld [smem:[#allocation0]]
  $region14: #{pixel_norm.1} parent=0
    _
  %s4 = ssub.s32 1, %s2
  %s5 = scalar_select 0, %s4, %s2
  // Predicated region
  $region2: #{pixel_norm.1} parent=0 // pred_check
    _
  $region3: #{pixel_norm.1} parent=0 // pred_check_branch
    %7 = sbr.rel (0) target = $region5
  $region4: #{pixel_norm.1} parent=0 // pred_region
    _
  $region5: #{pixel_norm.1} parent=0 // pred_fallthru
    _
  %v8 = vld [vmem:[%s0] sm:$0xff]
  %v9 = vld [vmem:[%s0 + $0x8] sm:$0xff]
  %v10 = vmul.f32 %v8, %v8
  %v11 = vmul.f32 %v9, %v9
  %14 = vst [vmem:[#allocation1] ss:$2 sm:$0xff] %v10
  %v15 = vld.sshfl [vmem:[#allocation1] sm:$0xff pattern:$0x75316420]
  %v16 = vld.sshfl [vmem:[#allocation1 + $0x8] sm:$0xff pattern:$0x75316420]
  %s17 = scalar_lea.vmem [#allocation1], 16
  %18 = vst [vmem:[%s17] ss:$2 sm:$0xff] %v11
  %v19 = vld.sshfl [vmem:[#allocation1 + $0x10] sm:$0xff pattern:$0x75316420]
  %v20 = vld.sshfl [vmem:[#allocation1 + $0x18] sm:$0xff pattern:$0x75316420]
  %vm25 = vcmask 1043456
  %v26 = vsel %vm25, %v15, 0.0
  %v27 = vrot.slane %v26, 4
  %v28 = vadd.f32 %v26, %v27
  %v29 = vrot.slane %v28, 2
  %v30 = vadd.f32 %v28, %v29
  %v31 = vrot.slane %v30, 1
  %v32 = vadd.f32 %v30, %v31
  %v33 = vsel %vm25, %v16, 0.0
  %v34 = vrot.slane %v33, 4
  %v35 = vadd.f32 %v33, %v34
  %v36 = vrot.slane %v35, 2
  %v37 = vadd.f32 %v35, %v36
  %v38 = vrot.slane %v37, 1
  %v39 = vadd.f32 %v37, %v38
  %v40 = vsel %vm25, %v19, 0.0
  %v41 = vrot.slane %v40, 4
  %v42 = vadd.f32 %v40, %v41
  %v43 = vrot.slane %v42, 2
  %v44 = vadd.f32 %v42, %v43
  %v45 = vrot.slane %v44, 1
  %v46 = vadd.f32 %v44, %v45
  %v47 = vsel %vm25, %v20, 0.0
  %v48 = vrot.slane %v47, 4
  %v49 = vadd.f32 %v47, %v48
  %v50 = vrot.slane %v49, 2
  %v51 = vadd.f32 %v49, %v50
  %v52 = vrot.slane %v51, 1
  %v53 = vadd.f32 %v51, %v52
  %v54 = vrcp.pop 4.0
  %v55 = vmul.f32 4.0, %v54
  %v56 = vsub.f32 1.0, %v55
  %v57 = vmul.f32 %v54, %v56
  %v58 = vadd.f32 %v54, %v57
  %vm59 = vweird.f32 %v54
  %v60 = vsel %vm59, %v54, %v58
  %v61 = vmul.f32 %v32, %v60
  %v62 = vmul.f32 %v39, %v60
  %v63 = vmul.f32 %v46, %v60
  %v64 = vmul.f32 %v53, %v60
  %v65 = vadd.f32 %v61, 1.1920929e-07
  %v66 = vadd.f32 %v62, 1.1920929e-07
  %v67 = vadd.f32 %v63, 1.1920929e-07
  %v68 = vadd.f32 %v64, 1.1920929e-07
  %v69 = vrsqrt.pop %v65
  %v70 = vmul.f32 %v69, %v65
  %v71 = vmul.f32 %v70, %v69
  %v72 = vmul.f32 0.5, %v71
  %v73 = vsub.f32 1.5, %v72
  %v74 = vmul.f32 %v69, %v73
  %vm75 = vweird.f32 %v65
  %vm76 = vweird.f32 %v69
  %vm77 = vmor %vm75, %vm76
  %v78 = vsel %vm77, %v69, %v74
  %v79 = vrsqrt.pop %v66
  %v80 = vmul.f32 %v79, %v66
  %v81 = vmul.f32 %v80, %v79
  %v82 = vmul.f32 0.5, %v81
  %v83 = vsub.f32 1.5, %v82
  %v84 = vmul.f32 %v79, %v83
  %vm85 = vweird.f32 %v66
  %vm86 = vweird.f32 %v79
  %vm87 = vmor %vm85, %vm86
  %v88 = vsel %vm87, %v79, %v84
  %v89 = vrsqrt.pop %v67
  %v90 = vmul.f32 %v89, %v67
  %v91 = vmul.f32 %v90, %v89
  %v92 = vmul.f32 0.5, %v91
  %v93 = vsub.f32 1.5, %v92
  %v94 = vmul.f32 %v89, %v93
  %vm95 = vweird.f32 %v67
  %vm96 = vweird.f32 %v89
  %vm97 = vmor %vm95, %vm96
  %v98 = vsel %vm97, %v89, %v94
  %v99 = vrsqrt.pop %v68
  %v100 = vmul.f32 %v99, %v68
  %v101 = vmul.f32 %v100, %v99
  %v102 = vmul.f32 0.5, %v101
  %v103 = vsub.f32 1.5, %v102
  %v104 = vmul.f32 %v99, %v103
  %vm105 = vweird.f32 %v68
  %vm106 = vweird.f32 %v99
  %vm107 = vmor %vm105, %vm106
  %v108 = vsel %vm107, %v99, %v104
  %v113 = vrot.slane %v88, 4
  %v114 = vrot.slane %v108, 4
  %v115 = vsel %vm25, %v78, %v113
  %v116 = vsel %vm25, %v98, %v114
  %v119 = vmul.f32 %v8, %v115
  %v120 = vmul.f32 %v9, %v116
  %121 = vst [vmem:[%s1] sm:$0xff] %v119
  %122 = vst [vmem:[%s1 + $0x8] sm:$0xff] %v120
  // Predicated region
  $region6: #{pixel_norm.1} parent=0 // pred_check
    _
  $region7: #{pixel_norm.1} parent=0 // pred_check_branch
    %124 = sbr.rel (0) target = $region9
  $region8: #{pixel_norm.1} parent=0 // pred_region
    _
  $region9: #{pixel_norm.1} parent=0 // pred_fallthru
    _
  // Predicated region
  $region10: #{pixel_norm.1} parent=0 // pred_check
    _
  $region11: #{pixel_norm.1} parent=0 // pred_check_branch
    %126 = sbr.rel (0) target = $region13
  $region12: #{pixel_norm.1} parent=0 // pred_region
    _
  $region13: #{pixel_norm.1} parent=0 // pred_fallthru
    _

</llo_original>
